<compile_context>
chip_gen: v7x
topology: tpu7x:2x2x1
jax: 0.10.0
libtpu: 0.0.40
codegen_flags: <defaults>
</compile_context>

<pallas_src>
import functools

import jax
import jax.numpy as jnp
from jax import lax
from jax.experimental import pallas as pl
from jax.experimental.pallas import tpu as pltpu


_ROW_TARGET = 512  # target rows in the matmul M dimension per grid step


# ----------------------------------------------------------------------------
# Fused kernel
# ----------------------------------------------------------------------------
def _make_double_conv_kernel(nb, H, W, Cin, Cmid, Cout, negative_slope,
                             compute_dtype):
    """Fused (conv3x3 + folded-BN + activation) x2 kernel.

    Block layout (per grid step, nb images packed along the matmul M dim):
      x_ref:  (nb, Cin, H, W)            NCHW input block
      w1_ref: (3*Cin*W,  Cmid*W)  bf16   stacked banded weights (kh along K)
      s1/b1:  (1, Cmid*W)         f32    folded BN scale / bias (lane = c*W+j)
      w2_ref: (3*Cmid*W, Cout*W)  bf16
      s2/b2:  (1, Cout*W)         f32
      o_ref:  (nb, Cout, H, W)           NCHW output block
    """
    M = nb * H

    def kernel(x_ref, w1_ref, s1_ref, b1_ref, w2_ref, s2_ref, b2_ref, o_ref):
        # ---- hoisted once, shared by both conv stages ------------------------
        row = lax.broadcasted_iota(jnp.int32, (M, 1), 0)
        if nb == 1:
            rem = row
        elif (H & (H - 1)) == 0:
            rem = jnp.bitwise_and(row, H - 1)
        else:
            # TODO(synk): for general (non power-of-2) H build this from a
            # per-image iota instead of an integer modulo.
            rem = row % H
        up_ok = rem >= 1          # a row above exists within the same image
        dn_ok = rem <= H - 2      # a row below exists within the same image

        # ---- NCHW block -> (M, Cin*W) channel-major lanes, done in-VMEM ------
        xb = x_ref[...]                                       # (nb, Cin, H, W)
        cols = [xb[:, ci, :, :].reshape(M, W) for ci in range(Cin)]
        x2 = cols[0] if Cin == 1 else jnp.concatenate(cols, axis=-1)

        def conv_bn_act(v, w_ref, s_ref, b_ref):
            # 3x3 SAME conv as a single MXU contraction with K = 3 * v.shape[1]:
            # kh taps = (masked) row-rolled copies concatenated along K,
            # kw taps = banded structure baked into the weight matrix.
            up = jnp.where(up_ok, jnp.roll(v, 1, axis=0), 0.0)    # x[r-1] (kh=0)
            dn = jnp.where(dn_ok, jnp.roll(v, -1, axis=0), 0.0)   # x[r+1] (kh=2)
            k = jnp.concatenate([up, v, dn], axis=-1).astype(compute_dtype)
            acc = jnp.dot(k, w_ref[...], preferred_element_type=jnp.float32)
            y = acc * s_ref[...] + b_ref[...]                     # folded BN, f32
            if negative_slope:
                return jnp.maximum(y, negative_slope * y)         # LeakyReLU
            return jnp.maximum(y, 0.0)                            # ReLU

        h = conv_bn_act(x2, w1_ref, s1_ref, b1_ref)   # (M, Cmid*W), stays on-chip
        y = conv_bn_act(h, w2_ref, s2_ref, b2_ref)    # (M, Cout*W)
        y = y.astype(o_ref.dtype)

        # ---- (M, Cout*W) channel-major lanes -> NCHW output block, in-VMEM ---
        for co in range(Cout):
            o_ref[:, co, :, :] = y[:, co * W:(co + 1) * W].reshape(nb, H, W)

    return kernel


# ----------------------------------------------------------------------------
# Wrapper helpers
# ----------------------------------------------------------------------------
def _tpu_hints():
    """Best-effort device query: (VMEM bytes per core, looks like v7x?)."""
    vmem = 128 << 20
    try:
        info = pltpu.get_tpu_info()
        vmem = int(getattr(info, "vmem_capacity_bytes", vmem))
    except Exception:
        pass
    # v7x: 64 MiB VMEM / TensorCore and 2 TensorCores per chip.
    # v5e / v6e: 128 MiB and a single TensorCore.
    two_core = vmem <= (96 << 20)
    return vmem, two_core


def _vmem_bytes_needed(nb, H, W, Cin, Cmid, Cout):
    """Rough per-grid-step VMEM footprint (double-buffered I/O + weights + live)."""
    f32, bf16 = 4, 2
    M = nb * H
    io = 2 * nb * H * W * (Cin + Cout) * f32                       # 2x-buffered blocks
    wgt = 2 * 3 * W * W * (Cin * Cmid + Cmid * Cout) * bf16 \
        + 2 * 2 * W * (Cmid + Cout) * f32                          # weights + BN
    live = M * W * (3 * Cin * (f32 + bf16) + 3 * Cmid * (f32 + bf16)
                    + 2 * Cmid * f32 + 2 * Cout * f32)             # in-flight values
    return io + wgt + live


def _pick_batch_block(N, H, fits, two_core):
    """Pack images into the matmul M dim (target nb*H <= _ROW_TARGET, VMEM-fit).

    Single-TC parts (v5e/v6e): prefer a single grid step (largest nb).
    v7x megacore: keep >= 2 grid steps when possible so both TCs get work."""
    if H % 8 != 0:
        # Keep the (nb, H, W) -> (nb*H, W) reshape sublane-aligned (free).
        return 1
    divisors = [d for d in range(1, N + 1) if N % d == 0 and fits(d)]
    if not divisors:
        return 1
    small = [d for d in divisors if d * H <= _ROW_TARGET]
    cands = small if small else [min(divisors)]
    if two_core:
        multi = [d for d in cands if N // d >= 2]
        if multi:
            return max(multi)
    return max(cands)


def _banded_weights(w_oihw, W):
    """(Cout, Cin, 3, 3) torch-layout weights -> (3*Cin*W, Cout*W) stacked bands.

    Channel-major lanes on both sides (row = kh*Cin*W + ci*W + j_in,
    col = co*W + j_out); kw = j_in - j_out + 1 when in [0, 2], else 0
    (implements SAME zero-padding along W)."""
    Cout, Cin = w_oihw.shape[0], w_oihw.shape[1]
    w = jnp.transpose(w_oihw, (2, 3, 1, 0))          # (kh, kw, ci, co)
    j_in = jnp.arange(W)[:, None]
    j_out = jnp.arange(W)[None, :]
    kw = j_in - j_out + 1                            # (W, W)
    valid = (kw >= 0) & (kw <= 2)
    kw_c = jnp.clip(kw, 0, 2)
    bands = []
    for kh in range(3):
        b = w[kh][kw_c]                              # (W_in, W_out, Cin, Cout)
        b = jnp.where(valid[:, :, None, None], b, 0.0)
        b = jnp.transpose(b, (2, 0, 3, 1)).reshape(Cin * W, Cout * W)
        bands.append(b)
    return jnp.concatenate(bands, axis=0)            # (3*Cin*W, Cout*W)


def _fold_bn(gamma, beta, running_mean, running_var, eps=1e-5):
    scale = gamma / jnp.sqrt(running_var + eps)
    bias = beta - running_mean * scale
    return scale, bias


def _double_conv(x, w1m, s1, b1, w2m, s2, b2, *, negative_slope, compute_dtype,
                 vmem_cap, two_core):
    """x: (N, Cin, H, W) NCHW -> (N, Cout, H, W) NCHW, both conv stages fused."""
    N, Cin, H, W = x.shape
    Cmid = s1.shape[1] // W
    Cout = s2.shape[1] // W

    cap = max(int(0.6 * vmem_cap), 24 << 20)   # ~38 MiB on v7x, ~76 MiB on v5e/v6e

    def fits(d):
        return _vmem_bytes_needed(d, H, W, Cin, Cmid, Cout) + (4 << 20) <= cap

    nb = _pick_batch_block(N, H, fits, two_core)
    need = _vmem_bytes_needed(nb, H, W, Cin, Cmid, Cout)
    vmem_limit = int(min(cap, max(2 * need + (2 << 20), 32 << 20)))

    kernel = _make_double_conv_kernel(nb, H, W, Cin, Cmid, Cout,
                                      negative_slope, compute_dtype)

    return pl.pallas_call(
        kernel,
        out_shape=jax.ShapeDtypeStruct((N, Cout, H, W), jnp.float32),
        grid_spec=pltpu.PrefetchScalarGridSpec(
            num_scalar_prefetch=0,
            grid=(N // nb,),
            in_specs=[
                pl.BlockSpec((nb, Cin, H, W), lambda n: (n, 0, 0, 0)),
                # Grid-invariant operands (constant index maps -> fetched once).
                # TODO(synk): single-buffer via pipeline_mode=pl.Buffered(1) at
                # large channel counts to halve their VMEM footprint.
                pl.BlockSpec((3 * Cin * W, Cmid * W), lambda n: (0, 0)),
                pl.BlockSpec((1, Cmid * W), lambda n: (0, 0)),
                pl.BlockSpec((1, Cmid * W), lambda n: (0, 0)),
                pl.BlockSpec((3 * Cmid * W, Cout * W), lambda n: (0, 0)),
                pl.BlockSpec((1, Cout * W), lambda n: (0, 0)),
                pl.BlockSpec((1, Cout * W), lambda n: (0, 0)),
            ],
            out_specs=pl.BlockSpec((nb, Cout, H, W), lambda n: (n, 0, 0, 0)),
        ),
        compiler_params=pltpu.CompilerParams(
            dimension_semantics=("parallel",),
            vmem_limit_bytes=vmem_limit,
        ),
    )(x, w1m, s1, b1, w2m, s2, b2)


# ----------------------------------------------------------------------------
# Module
# ----------------------------------------------------------------------------
class DoubleConvPallas:
    """(conv3x3 no-bias => BN(inference, folded) => ReLU/LeakyReLU) * 2.

    NCHW in / NCHW out, matching the PyTorch module's interface, with the
    layout change handled inside the kernel (no XLA transposes)."""

    def __init__(self, in_channels, out_channels, leaky=False, mid_channels=None,
                 key=None, compute_dtype=jnp.bfloat16):
        if not mid_channels:
            mid_channels = out_channels
        if key is None:
            key = jax.random.PRNGKey(0)
        k1, k2 = jax.random.split(key)
        # Deterministic synthetic parameters (module __init__ only defines shapes).
        self.w1 = 0.1 * jax.random.normal(
            k1, (mid_channels, in_channels, 3, 3), jnp.float32)
        self.w2 = 0.1 * jax.random.normal(
            k2, (out_channels, mid_channels, 3, 3), jnp.float32)
        # BatchNorm (inference) parameters, non-trivial but deterministic.
        g1 = 1.0 + 0.05 * jnp.arange(mid_channels, dtype=jnp.float32)
        b1 = 0.01 * jnp.arange(mid_channels, dtype=jnp.float32)
        m1 = 0.02 * jnp.arange(mid_channels, dtype=jnp.float32)
        v1 = 1.0 + 0.03 * jnp.arange(mid_channels, dtype=jnp.float32)
        g2 = 1.0 + 0.04 * jnp.arange(out_channels, dtype=jnp.float32)
        b2 = -0.01 * jnp.arange(out_channels, dtype=jnp.float32)
        m2 = -0.02 * jnp.arange(out_channels, dtype=jnp.float32)
        v2 = 1.0 + 0.02 * jnp.arange(out_channels, dtype=jnp.float32)
        self.scale1, self.bias1 = _fold_bn(g1, b1, m1, v1)
        self.scale2, self.bias2 = _fold_bn(g2, b2, m2, v2)
        self.negative_slope = 0.01 if leaky else 0.0
        self.compute_dtype = compute_dtype
        self._vmem_cap, self._two_core = _tpu_hints()

    @functools.partial(jax.jit, static_argnums=0)
    def __call__(self, x_nchw):
        N, Cin, H, W = x_nchw.shape
        dt = self.compute_dtype
        # Banded weights: kw taps folded into a (K, N) matrix per kh tap, kh taps
        # stacked along K so each conv stage is a single bf16 MXU contraction.
        w1m = _banded_weights(self.w1, W).astype(dt)    # (3*Cin*W,  Cmid*W)
        w2m = _banded_weights(self.w2, W).astype(dt)    # (3*Cmid*W, Cout*W)
        # Folded BN laid out channel-major over lanes (lane = c*W + j), kept f32.
        s1 = jnp.repeat(self.scale1, W).reshape(1, -1)
        b1 = jnp.repeat(self.bias1, W).reshape(1, -1)
        s2 = jnp.repeat(self.scale2, W).reshape(1, -1)
        b2 = jnp.repeat(self.bias2, W).reshape(1, -1)
        return _double_conv(x_nchw, w1m, s1, b1, w2m, s2, b2,
                            negative_slope=self.negative_slope,
                            compute_dtype=dt,
                            vmem_cap=self._vmem_cap,
                            two_core=self._two_core)


# ----------------------------------------------------------------------------
# Pure-JAX reference for correctness checking
# ----------------------------------------------------------------------------
def _reference(x_nchw, mod):
    def conv(x, w_oihw, scale, bias, slope):
        y = lax.conv_general_dilated(
            x, w_oihw, window_strides=(1, 1), padding="SAME",
            dimension_numbers=("NCHW", "OIHW", "NCHW"))
        y = y * scale.reshape(1, -1, 1, 1) + bias.reshape(1, -1, 1, 1)
        return jnp.where(y > 0, y, slope * y)

    h = conv(x_nchw, mod.w1, mod.scale1, mod.bias1, mod.negative_slope)
    return conv(h, mod.w2, mod.scale2, mod.bias2, mod.negative_slope)


if __name__ == "__main__":
    key = jax.random.PRNGKey(0)
    kx, kp = jax.random.split(key)
    N, Cin, H, W = 2, 4, 16, 16
    Cout = 8
    x = jax.random.normal(kx, (N, Cin, H, W), jnp.float32)

    mod = DoubleConvPallas(Cin, Cout, key=kp)
    out = jax.block_until_ready(mod(x))
    assert out.shape == (N, Cout, H, W), out.shape

    ref = jax.block_until_ready(_reference(x, mod))
    # bf16 matmul path -> relaxed tolerance vs. the f32 XLA reference.
    err = float(jnp.max(jnp.abs(out - ref)))
    assert err < 5e-2, f"mismatch vs reference: max abs err = {err}"

    print("KERNEL_OK")
</pallas_src>

<mosaic_0001>
module attributes {stable_mosaic.version = 11 : i64} {
  func.func @kernel(%arg0: i32, %arg1: memref<2x4x16x16xf32, #tpu.memory_space<vmem>>, %arg2: memref<192x128xbf16, #tpu.memory_space<vmem>>, %arg3: memref<1x128xf32, #tpu.memory_space<vmem>>, %arg4: memref<1x128xf32, #tpu.memory_space<vmem>>, %arg5: memref<384x128xbf16, #tpu.memory_space<vmem>>, %arg6: memref<1x128xf32, #tpu.memory_space<vmem>>, %arg7: memref<1x128xf32, #tpu.memory_space<vmem>>, %arg8: memref<2x8x16x16xf32, #tpu.memory_space<vmem>>) attributes {dimension_semantics = [#tpu.dimension_semantics<parallel>], iteration_bounds = array<i64: 1>, scalar_prefetch = 0 : i64, scratch_operands = 0 : i64, tpu.core_type = #tpu.core_type<tc>, window_params = [{transform_indices = @transform_0, window_bounds = array<i64: 2, 4, 16, 16>}, {pipeline_mode = #tpu.pipeline_mode<synchronous>, transform_indices = @transform_1, window_bounds = array<i64: 192, 128>}, {pipeline_mode = #tpu.pipeline_mode<synchronous>, transform_indices = @transform_2, window_bounds = array<i64: 1, 128>}, {pipeline_mode = #tpu.pipeline_mode<synchronous>, transform_indices = @transform_3, window_bounds = array<i64: 1, 128>}, {pipeline_mode = #tpu.pipeline_mode<synchronous>, transform_indices = @transform_4, window_bounds = array<i64: 384, 128>}, {pipeline_mode = #tpu.pipeline_mode<synchronous>, transform_indices = @transform_5, window_bounds = array<i64: 1, 128>}, {pipeline_mode = #tpu.pipeline_mode<synchronous>, transform_indices = @transform_6, window_bounds = array<i64: 1, 128>}, {transform_indices = @transform_7, window_bounds = array<i64: 2, 8, 16, 16>}]} {
    %0 = tpu.iota {dimensions = array<i32: 0>} : vector<32x1xi32>
    %c15_i32 = arith.constant 15 : i32
    %1 = vector.broadcast %c15_i32 : i32 to vector<32x1xi32>
    %2 = arith.andi %0, %1 : vector<32x1xi32>
    %c1_i32 = arith.constant 1 : i32
    %3 = vector.broadcast %c1_i32 : i32 to vector<32x1xi32>
    %4 = arith.cmpi sge, %2, %3 : vector<32x1xi32>
    %c14_i32 = arith.constant 14 : i32
    %5 = vector.broadcast %c14_i32 : i32 to vector<32x1xi32>
    %6 = arith.cmpi sle, %2, %5 : vector<32x1xi32>
    %c0 = arith.constant 0 : index
    %c0_0 = arith.constant 0 : index
    %c0_1 = arith.constant 0 : index
    %c0_2 = arith.constant 0 : index
    %7 = vector.load %arg1[%c0, %c0_0, %c0_1, %c0_2] : memref<2x4x16x16xf32, #tpu.memory_space<vmem>>, vector<2x4x16x16xf32>
    %8 = vector.extract_strided_slice %7 {offsets = [0, 0, 0, 0], sizes = [2, 1, 16, 16], strides = [1, 1, 1, 1]} : vector<2x4x16x16xf32> to vector<2x1x16x16xf32>
    %9 = vector.shape_cast %8 : vector<2x1x16x16xf32> to vector<2x16x16xf32>
    %10 = vector.shape_cast %9 : vector<2x16x16xf32> to vector<32x16xf32>
    %11 = vector.extract_strided_slice %7 {offsets = [0, 1, 0, 0], sizes = [2, 1, 16, 16], strides = [1, 1, 1, 1]} : vector<2x4x16x16xf32> to vector<2x1x16x16xf32>
    %12 = vector.shape_cast %11 : vector<2x1x16x16xf32> to vector<2x16x16xf32>
    %13 = vector.shape_cast %12 : vector<2x16x16xf32> to vector<32x16xf32>
    %14 = vector.extract_strided_slice %7 {offsets = [0, 2, 0, 0], sizes = [2, 1, 16, 16], strides = [1, 1, 1, 1]} : vector<2x4x16x16xf32> to vector<2x1x16x16xf32>
    %15 = vector.shape_cast %14 : vector<2x1x16x16xf32> to vector<2x16x16xf32>
    %16 = vector.shape_cast %15 : vector<2x16x16xf32> to vector<32x16xf32>
    %17 = vector.extract_strided_slice %7 {offsets = [0, 3, 0, 0], sizes = [2, 1, 16, 16], strides = [1, 1, 1, 1]} : vector<2x4x16x16xf32> to vector<2x1x16x16xf32>
    %18 = vector.shape_cast %17 : vector<2x1x16x16xf32> to vector<2x16x16xf32>
    %19 = vector.shape_cast %18 : vector<2x16x16xf32> to vector<32x16xf32>
    %20 = tpu.concatenate %10, %13, %16, %19 in 1 : vector<32x16xf32>, vector<32x16xf32>, vector<32x16xf32>, vector<32x16xf32> -> vector<32x64xf32>
    %21 = vector.extract_strided_slice %20 {offsets = [31, 0], sizes = [1, 64], strides = [1, 1]} : vector<32x64xf32> to vector<1x64xf32>
    %22 = vector.extract_strided_slice %20 {offsets = [0, 0], sizes = [31, 64], strides = [1, 1]} : vector<32x64xf32> to vector<31x64xf32>
    %23 = tpu.concatenate %21, %22 in 0 : vector<1x64xf32>, vector<31x64xf32> -> vector<32x64xf32>
    %cst = arith.constant 0.000000e+00 : f32
    %24 = vector.shape_cast %4 : vector<32x1xi1> to vector<32x1xi1>
    %25 = vector.broadcast %24 : vector<32x1xi1> to vector<32x64xi1>
    %26 = vector.broadcast %cst : f32 to vector<32x64xf32>
    %27 = arith.select %25, %23, %26 : vector<32x64xi1>, vector<32x64xf32>
    %28 = vector.extract_strided_slice %20 {offsets = [1, 0], sizes = [31, 64], strides = [1, 1]} : vector<32x64xf32> to vector<31x64xf32>
    %29 = vector.extract_strided_slice %20 {offsets = [0, 0], sizes = [1, 64], strides = [1, 1]} : vector<32x64xf32> to vector<1x64xf32>
    %30 = tpu.concatenate %28, %29 in 0 : vector<31x64xf32>, vector<1x64xf32> -> vector<32x64xf32>
    %cst_3 = arith.constant 0.000000e+00 : f32
    %31 = vector.shape_cast %6 : vector<32x1xi1> to vector<32x1xi1>
    %32 = vector.broadcast %31 : vector<32x1xi1> to vector<32x64xi1>
    %33 = vector.broadcast %cst_3 : f32 to vector<32x64xf32>
    %34 = arith.select %32, %30, %33 : vector<32x64xi1>, vector<32x64xf32>
    %35 = tpu.concatenate %27, %20, %34 in 1 : vector<32x64xf32>, vector<32x64xf32>, vector<32x64xf32> -> vector<32x192xf32>
    %36 = arith.truncf %35 : vector<32x192xf32> to vector<32x192xbf16>
    %c0_4 = arith.constant 0 : index
    %c0_5 = arith.constant 0 : index
    %37 = vector.load %arg2[%c0_4, %c0_5] : memref<192x128xbf16, #tpu.memory_space<vmem>>, vector<192x128xbf16>
    %cst_6 = arith.constant dense<0.000000e+00> : vector<32x128xf32>
    %38 = tpu.matmul %36, %37, %cst_6 {dimension_numbers = #tpu.dot_dimension_numbers<[1], [0], [0], [1], [0, 0, 1, 1], [], []>} : vector<32x192xbf16>, vector<192x128xbf16>, vector<32x128xf32> -> vector<32x128xf32>
    %c0_7 = arith.constant 0 : index
    %c0_8 = arith.constant 0 : index
    %39 = vector.load %arg3[%c0_7, %c0_8] : memref<1x128xf32, #tpu.memory_space<vmem>>, vector<1x128xf32>
    %40 = vector.broadcast %39 : vector<1x128xf32> to vector<32x128xf32>
    %41 = arith.mulf %38, %40 : vector<32x128xf32>
    %c0_9 = arith.constant 0 : index
    %c0_10 = arith.constant 0 : index
    %42 = vector.load %arg4[%c0_9, %c0_10] : memref<1x128xf32, #tpu.memory_space<vmem>>, vector<1x128xf32>
    %43 = vector.broadcast %42 : vector<1x128xf32> to vector<32x128xf32>
    %44 = arith.addf %41, %43 : vector<32x128xf32>
    %cst_11 = arith.constant 0.000000e+00 : f32
    %45 = vector.broadcast %cst_11 : f32 to vector<32x128xf32>
    %46 = arith.maximumf %44, %45 : vector<32x128xf32>
    %47 = vector.extract_strided_slice %46 {offsets = [31, 0], sizes = [1, 128], strides = [1, 1]} : vector<32x128xf32> to vector<1x128xf32>
    %48 = vector.extract_strided_slice %46 {offsets = [0, 0], sizes = [31, 128], strides = [1, 1]} : vector<32x128xf32> to vector<31x128xf32>
    %49 = tpu.concatenate %47, %48 in 0 : vector<1x128xf32>, vector<31x128xf32> -> vector<32x128xf32>
    %cst_12 = arith.constant 0.000000e+00 : f32
    %50 = vector.shape_cast %4 : vector<32x1xi1> to vector<32x1xi1>
    %51 = vector.broadcast %50 : vector<32x1xi1> to vector<32x128xi1>
    %52 = vector.broadcast %cst_12 : f32 to vector<32x128xf32>
    %53 = arith.select %51, %49, %52 : vector<32x128xi1>, vector<32x128xf32>
    %54 = vector.extract_strided_slice %46 {offsets = [1, 0], sizes = [31, 128], strides = [1, 1]} : vector<32x128xf32> to vector<31x128xf32>
    %55 = vector.extract_strided_slice %46 {offsets = [0, 0], sizes = [1, 128], strides = [1, 1]} : vector<32x128xf32> to vector<1x128xf32>
    %56 = tpu.concatenate %54, %55 in 0 : vector<31x128xf32>, vector<1x128xf32> -> vector<32x128xf32>
    %cst_13 = arith.constant 0.000000e+00 : f32
    %57 = vector.shape_cast %6 : vector<32x1xi1> to vector<32x1xi1>
    %58 = vector.broadcast %57 : vector<32x1xi1> to vector<32x128xi1>
    %59 = vector.broadcast %cst_13 : f32 to vector<32x128xf32>
    %60 = arith.select %58, %56, %59 : vector<32x128xi1>, vector<32x128xf32>
    %61 = tpu.concatenate %53, %46, %60 in 1 : vector<32x128xf32>, vector<32x128xf32>, vector<32x128xf32> -> vector<32x384xf32>
    %62 = arith.truncf %61 : vector<32x384xf32> to vector<32x384xbf16>
    %c0_14 = arith.constant 0 : index
    %c0_15 = arith.constant 0 : index
    %63 = vector.load %arg5[%c0_14, %c0_15] : memref<384x128xbf16, #tpu.memory_space<vmem>>, vector<384x128xbf16>
    %cst_16 = arith.constant dense<0.000000e+00> : vector<32x128xf32>
    %64 = tpu.matmul %62, %63, %cst_16 {dimension_numbers = #tpu.dot_dimension_numbers<[1], [0], [0], [1], [0, 0, 1, 1], [], []>} : vector<32x384xbf16>, vector<384x128xbf16>, vector<32x128xf32> -> vector<32x128xf32>
    %c0_17 = arith.constant 0 : index
    %c0_18 = arith.constant 0 : index
    %65 = vector.load %arg6[%c0_17, %c0_18] : memref<1x128xf32, #tpu.memory_space<vmem>>, vector<1x128xf32>
    %66 = vector.broadcast %65 : vector<1x128xf32> to vector<32x128xf32>
    %67 = arith.mulf %64, %66 : vector<32x128xf32>
    %c0_19 = arith.constant 0 : index
    %c0_20 = arith.constant 0 : index
    %68 = vector.load %arg7[%c0_19, %c0_20] : memref<1x128xf32, #tpu.memory_space<vmem>>, vector<1x128xf32>
    %69 = vector.broadcast %68 : vector<1x128xf32> to vector<32x128xf32>
    %70 = arith.addf %67, %69 : vector<32x128xf32>
    %cst_21 = arith.constant 0.000000e+00 : f32
    %71 = vector.broadcast %cst_21 : f32 to vector<32x128xf32>
    %72 = arith.maximumf %70, %71 : vector<32x128xf32>
    %73 = vector.extract_strided_slice %72 {offsets = [0, 0], sizes = [32, 16], strides = [1, 1]} : vector<32x128xf32> to vector<32x16xf32>
    %74 = vector.shape_cast %73 : vector<32x16xf32> to vector<2x16x16xf32>
    %c0_22 = arith.constant 0 : index
    %c0_23 = arith.constant 0 : index
    %c0_24 = arith.constant 0 : index
    %c0_25 = arith.constant 0 : index
    %75 = vector.load %arg8[%c0_22, %c0_23, %c0_24, %c0_25] : memref<2x8x16x16xf32, #tpu.memory_space<vmem>>, vector<2x1x16x16xf32>
    %76 = vector.shape_cast %75 : vector<2x1x16x16xf32> to vector<2x16x16xf32>
    %77 = vector.shape_cast %74 : vector<2x16x16xf32> to vector<2x1x16x16xf32>
    tpu.vector_store %arg8[%c0_22, %c0_23, %c0_24, %c0_25], %77 {strides = array<i32>} : memref<2x8x16x16xf32, #tpu.memory_space<vmem>>, vector<2x1x16x16xf32>,
    %78 = vector.extract_strided_slice %72 {offsets = [0, 16], sizes = [32, 16], strides = [1, 1]} : vector<32x128xf32> to vector<32x16xf32>
    %79 = vector.shape_cast %78 : vector<32x16xf32> to vector<2x16x16xf32>
    %c0_26 = arith.constant 0 : index
    %c1 = arith.constant 1 : index
    %c0_27 = arith.constant 0 : index
    %c0_28 = arith.constant 0 : index
    %80 = vector.load %arg8[%c0_26, %c1, %c0_27, %c0_28] : memref<2x8x16x16xf32, #tpu.memory_space<vmem>>, vector<2x1x16x16xf32>
    %81 = vector.shape_cast %80 : vector<2x1x16x16xf32> to vector<2x16x16xf32>
    %82 = vector.shape_cast %79 : vector<2x16x16xf32> to vector<2x1x16x16xf32>
    tpu.vector_store %arg8[%c0_26, %c1, %c0_27, %c0_28], %82 {strides = array<i32>} : memref<2x8x16x16xf32, #tpu.memory_space<vmem>>, vector<2x1x16x16xf32>,
    %83 = vector.extract_strided_slice %72 {offsets = [0, 32], sizes = [32, 16], strides = [1, 1]} : vector<32x128xf32> to vector<32x16xf32>
    %84 = vector.shape_cast %83 : vector<32x16xf32> to vector<2x16x16xf32>
    %c0_29 = arith.constant 0 : index
    %c2 = arith.constant 2 : index
    %c0_30 = arith.constant 0 : index
    %c0_31 = arith.constant 0 : index
    %85 = vector.load %arg8[%c0_29, %c2, %c0_30, %c0_31] : memref<2x8x16x16xf32, #tpu.memory_space<vmem>>, vector<2x1x16x16xf32>
    %86 = vector.shape_cast %85 : vector<2x1x16x16xf32> to vector<2x16x16xf32>
    %87 = vector.shape_cast %84 : vector<2x16x16xf32> to vector<2x1x16x16xf32>
    tpu.vector_store %arg8[%c0_29, %c2, %c0_30, %c0_31], %87 {strides = array<i32>} : memref<2x8x16x16xf32, #tpu.memory_space<vmem>>, vector<2x1x16x16xf32>,
    %88 = vector.extract_strided_slice %72 {offsets = [0, 48], sizes = [32, 16], strides = [1, 1]} : vector<32x128xf32> to vector<32x16xf32>
    %89 = vector.shape_cast %88 : vector<32x16xf32> to vector<2x16x16xf32>
    %c0_32 = arith.constant 0 : index
    %c3 = arith.constant 3 : index
    %c0_33 = arith.constant 0 : index
    %c0_34 = arith.constant 0 : index
    %90 = vector.load %arg8[%c0_32, %c3, %c0_33, %c0_34] : memref<2x8x16x16xf32, #tpu.memory_space<vmem>>, vector<2x1x16x16xf32>
    %91 = vector.shape_cast %90 : vector<2x1x16x16xf32> to vector<2x16x16xf32>
    %92 = vector.shape_cast %89 : vector<2x16x16xf32> to vector<2x1x16x16xf32>
    tpu.vector_store %arg8[%c0_32, %c3, %c0_33, %c0_34], %92 {strides = array<i32>} : memref<2x8x16x16xf32, #tpu.memory_space<vmem>>, vector<2x1x16x16xf32>,
    %93 = vector.extract_strided_slice %72 {offsets = [0, 64], sizes = [32, 16], strides = [1, 1]} : vector<32x128xf32> to vector<32x16xf32>
    %94 = vector.shape_cast %93 : vector<32x16xf32> to vector<2x16x16xf32>
    %c0_35 = arith.constant 0 : index
    %c4 = arith.constant 4 : index
    %c0_36 = arith.constant 0 : index
    %c0_37 = arith.constant 0 : index
    %95 = vector.load %arg8[%c0_35, %c4, %c0_36, %c0_37] : memref<2x8x16x16xf32, #tpu.memory_space<vmem>>, vector<2x1x16x16xf32>
    %96 = vector.shape_cast %95 : vector<2x1x16x16xf32> to vector<2x16x16xf32>
    %97 = vector.shape_cast %94 : vector<2x16x16xf32> to vector<2x1x16x16xf32>
    tpu.vector_store %arg8[%c0_35, %c4, %c0_36, %c0_37], %97 {strides = array<i32>} : memref<2x8x16x16xf32, #tpu.memory_space<vmem>>, vector<2x1x16x16xf32>,
    %98 = vector.extract_strided_slice %72 {offsets = [0, 80], sizes = [32, 16], strides = [1, 1]} : vector<32x128xf32> to vector<32x16xf32>
    %99 = vector.shape_cast %98 : vector<32x16xf32> to vector<2x16x16xf32>
    %c0_38 = arith.constant 0 : index
    %c5 = arith.constant 5 : index
    %c0_39 = arith.constant 0 : index
    %c0_40 = arith.constant 0 : index
    %100 = vector.load %arg8[%c0_38, %c5, %c0_39, %c0_40] : memref<2x8x16x16xf32, #tpu.memory_space<vmem>>, vector<2x1x16x16xf32>
    %101 = vector.shape_cast %100 : vector<2x1x16x16xf32> to vector<2x16x16xf32>
    %102 = vector.shape_cast %99 : vector<2x16x16xf32> to vector<2x1x16x16xf32>
    tpu.vector_store %arg8[%c0_38, %c5, %c0_39, %c0_40], %102 {strides = array<i32>} : memref<2x8x16x16xf32, #tpu.memory_space<vmem>>, vector<2x1x16x16xf32>,
    %103 = vector.extract_strided_slice %72 {offsets = [0, 96], sizes = [32, 16], strides = [1, 1]} : vector<32x128xf32> to vector<32x16xf32>
    %104 = vector.shape_cast %103 : vector<32x16xf32> to vector<2x16x16xf32>
    %c0_41 = arith.constant 0 : index
    %c6 = arith.constant 6 : index
    %c0_42 = arith.constant 0 : index
    %c0_43 = arith.constant 0 : index
    %105 = vector.load %arg8[%c0_41, %c6, %c0_42, %c0_43] : memref<2x8x16x16xf32, #tpu.memory_space<vmem>>, vector<2x1x16x16xf32>
    %106 = vector.shape_cast %105 : vector<2x1x16x16xf32> to vector<2x16x16xf32>
    %107 = vector.shape_cast %104 : vector<2x16x16xf32> to vector<2x1x16x16xf32>
    tpu.vector_store %arg8[%c0_41, %c6, %c0_42, %c0_43], %107 {strides = array<i32>} : memref<2x8x16x16xf32, #tpu.memory_space<vmem>>, vector<2x1x16x16xf32>,
    %108 = vector.extract_strided_slice %72 {offsets = [0, 112], sizes = [32, 16], strides = [1, 1]} : vector<32x128xf32> to vector<32x16xf32>
    %109 = vector.shape_cast %108 : vector<32x16xf32> to vector<2x16x16xf32>
    %c0_44 = arith.constant 0 : index
    %c7 = arith.constant 7 : index
    %c0_45 = arith.constant 0 : index
    %c0_46 = arith.constant 0 : index
    %110 = vector.load %arg8[%c0_44, %c7, %c0_45, %c0_46] : memref<2x8x16x16xf32, #tpu.memory_space<vmem>>, vector<2x1x16x16xf32>
    %111 = vector.shape_cast %110 : vector<2x1x16x16xf32> to vector<2x16x16xf32>
    %112 = vector.shape_cast %109 : vector<2x16x16xf32> to vector<2x1x16x16xf32>
    tpu.vector_store %arg8[%c0_44, %c7, %c0_45, %c0_46], %112 {strides = array<i32>} : memref<2x8x16x16xf32, #tpu.memory_space<vmem>>, vector<2x1x16x16xf32>,
    return
  }
  func.func @transform_0(%arg0: i32) -> (i32, i32, i32, i32) {
    %c0_i32 = arith.constant 0 : i32
    %c0_i32_0 = arith.constant 0 : i32
    %c0_i32_1 = arith.constant 0 : i32
    %c0_i32_2 = arith.constant 0 : i32
    return %arg0, %c0_i32, %c0_i32_0, %c0_i32_1 : i32, i32, i32, i32
  }
  func.func @transform_1(%arg0: i32) -> (i32, i32) {
    %c0_i32 = arith.constant 0 : i32
    %c0_i32_0 = arith.constant 0 : i32
    %c0_i32_1 = arith.constant 0 : i32
    return %c0_i32, %c0_i32_0 : i32, i32
  }
  func.func @transform_2(%arg0: i32) -> (i32, i32) {
    %c0_i32 = arith.constant 0 : i32
    %c0_i32_0 = arith.constant 0 : i32
    %c0_i32_1 = arith.constant 0 : i32
    return %c0_i32, %c0_i32_0 : i32, i32
  }
  func.func @transform_3(%arg0: i32) -> (i32, i32) {
    %c0_i32 = arith.constant 0 : i32
    %c0_i32_0 = arith.constant 0 : i32
    %c0_i32_1 = arith.constant 0 : i32
    return %c0_i32, %c0_i32_0 : i32, i32
  }
  func.func @transform_4(%arg0: i32) -> (i32, i32) {
    %c0_i32 = arith.constant 0 : i32
    %c0_i32_0 = arith.constant 0 : i32
    %c0_i32_1 = arith.constant 0 : i32
    return %c0_i32, %c0_i32_0 : i32, i32
  }
  func.func @transform_5(%arg0: i32) -> (i32, i32) {
    %c0_i32 = arith.constant 0 : i32
    %c0_i32_0 = arith.constant 0 : i32
    %c0_i32_1 = arith.constant 0 : i32
    return %c0_i32, %c0_i32_0 : i32, i32
  }
  func.func @transform_6(%arg0: i32) -> (i32, i32) {
    %c0_i32 = arith.constant 0 : i32
    %c0_i32_0 = arith.constant 0 : i32
    %c0_i32_1 = arith.constant 0 : i32
    return %c0_i32, %c0_i32_0 : i32, i32
  }
  func.func @transform_7(%arg0: i32) -> (i32, i32, i32, i32) {
    %c0_i32 = arith.constant 0 : i32
    %c0_i32_0 = arith.constant 0 : i32
    %c0_i32_1 = arith.constant 0 : i32
    %c0_i32_2 = arith.constant 0 : i32
    return %arg0, %c0_i32, %c0_i32_0, %c0_i32_1 : i32, i32, i32, i32
  }
}

</mosaic_0001>

<llo_original>
// kernel: a_call__.1
$region0: #{a_call__.1}
  #allocation0 [shape = 'u32[]', space=smem, size = 0x4, offset = 0x4, fixed_abs, tag = 'smem constant byte address 0x4 - core index']
  #allocation1 [shape = 'u32[144,128]{1,0:T(1,128)}', space=vmem, size = 0x12000, scoped, tag = 'internal scratch']
  %s0 = inlined_call_operand.vmem [shape: f32[2,4,16,16], index: 0, kind: input, shape index: {}]
  %s1 = inlined_call_operand.vmem [shape: bf16[192,128], index: 1, kind: input, shape index: {}]
  %s2 = inlined_call_operand.vmem [shape: f32[1,128], index: 2, kind: input, shape index: {}]
  %s3 = inlined_call_operand.vmem [shape: f32[1,128], index: 3, kind: input, shape index: {}]
  %s4 = inlined_call_operand.vmem [shape: bf16[384,128], index: 4, kind: input, shape index: {}]
  %s5 = inlined_call_operand.vmem [shape: f32[1,128], index: 5, kind: input, shape index: {}]
  %s6 = inlined_call_operand.vmem [shape: f32[1,128], index: 6, kind: input, shape index: {}]
  %s7 = inlined_call_operand.hbm [shape: f32[2,8,16,16], index: 7, kind: output, shape index: {}]
  %s8 = sld [smem:[#allocation0]]
  $region38: #{a_call__.1} parent=0
    _
  %s10 = ssub.s32 1, %s8
  %s11 = scalar_select 0, %s10, %s8
  $region1: #{a_call__.1} parent=0
    #allocation2 [shape = 'u8[131072]{0}', space=vmem, size = 0x20000, scoped, tag = 'output window, operand 0, single buffered']
    #allocation3 [shape = 's32[1]{0}', space=sflag, size = 0x4, scoped, tag = 'scoped memory for a_call__.1']
    %12 = vsyncpa [#allocation3], 0
    // Predicated region
    $region2: #{a_call__.1} parent=1 // pred_check
      _
    $region3: #{a_call__.1} parent=1 // pred_check_branch
      %14 = sbr.rel (0) target = $region5
    $region4: #{a_call__.1} parent=1 // pred_region
      _
    $region5: #{a_call__.1} parent=1 // pred_fallthru
      _
    // Predicated region
    $region6: #{a_call__.1} parent=1 // pred_check
      _
    $region7: #{a_call__.1} parent=1 // pred_check_branch
      %16 = sbr.rel (0) target = $region9
    $region8: #{a_call__.1} parent=1 // pred_region
      _
    $region9: #{a_call__.1} parent=1 // pred_fallthru
      _
    // Predicated region
    $region10: #{a_call__.1} parent=1 // pred_check
      _
    $region11: #{a_call__.1} parent=1 // pred_check_branch
      %18 = sbr.rel (0) target = $region13
    $region12: #{a_call__.1} parent=1 // pred_region
      _
    $region13: #{a_call__.1} parent=1 // pred_fallthru
      _
    // Predicated region
    $region14: #{a_call__.1} parent=1 // pred_check
      _
    $region15: #{a_call__.1} parent=1 // pred_check_branch
      %20 = sbr.rel (0) target = $region17
    $region16: #{a_call__.1} parent=1 // pred_region
      _
    $region17: #{a_call__.1} parent=1 // pred_fallthru
      _
    // Predicated region
    $region18: #{a_call__.1} parent=1 // pred_check
      _
    $region19: #{a_call__.1} parent=1 // pred_check_branch
      %22 = sbr.rel (0) target = $region21
    $region20: #{a_call__.1} parent=1 // pred_region
      _
    $region21: #{a_call__.1} parent=1 // pred_fallthru
      _
    // Predicated region
    $region22: #{a_call__.1} parent=1 // pred_check
      _
    $region23: #{a_call__.1} parent=1 // pred_check_branch
      %24 = sbr.rel (0) target = $region25
    $region24: #{a_call__.1} parent=1 // pred_region
      _
    $region25: #{a_call__.1} parent=1 // pred_fallthru
      _
    // Predicated region
    $region26: #{a_call__.1} parent=1 // pred_check
      _
    $region27: #{a_call__.1} parent=1 // pred_check_branch
      %26 = sbr.rel (0) target = $region29
    $region28: #{a_call__.1} parent=1 // pred_region
      _
    $region29: #{a_call__.1} parent=1 // pred_fallthru
      _
    %v28 = vlaneseq
    %v29 = vshrl.u32 %v28, 7
    %v30 = vadd.s32 %v29, 8
    %v31 = vadd.s32 %v29, 16
    %v32 = vadd.s32 %v29, 24
    %v33 = vand.u32 %v29, 15
    %v34 = vand.u32 %v30, 15
    %v35 = vand.u32 %v31, 15
    %v36 = vand.u32 %v32, 15
    %vm37 = vcmp.ge.s32.totalorder %v33, 1
    %vm38 = vcmp.ge.s32.totalorder %v34, 1
    %vm39 = vcmp.ge.s32.totalorder %v35, 1
    %vm40 = vcmp.ge.s32.totalorder %v36, 1
    %vm41 = vcmp.le.s32.totalorder %v33, 14
    %vm42 = vcmp.le.s32.totalorder %v34, 14
    %vm43 = vcmp.le.s32.totalorder %v35, 14
    %vm44 = vcmp.le.s32.totalorder %v36, 14
    %v45 = vld [vmem:[%s0] sm:$0xff]
    %v46 = vld [vmem:[%s0 + $0x8] sm:$0xff]
    %v47 = vld [vmem:[%s0 + $0x10] sm:$0xff]
    %v48 = vld [vmem:[%s0 + $0x18] sm:$0xff]
    %v49 = vld [vmem:[%s0 + $0x20] sm:$0xff]
    %v50 = vld [vmem:[%s0 + $0x28] sm:$0xff]
    %v51 = vld [vmem:[%s0 + $0x30] sm:$0xff]
    %v52 = vld [vmem:[%s0 + $0x38] sm:$0xff]
    %v53 = vld [vmem:[%s0 + $0x40] sm:$0xff]
    %v54 = vld [vmem:[%s0 + $0x48] sm:$0xff]
    %v55 = vld [vmem:[%s0 + $0x50] sm:$0xff]
    %v56 = vld [vmem:[%s0 + $0x58] sm:$0xff]
    %v57 = vld [vmem:[%s0 + $0x60] sm:$0xff]
    %v58 = vld [vmem:[%s0 + $0x68] sm:$0xff]
    %v59 = vld [vmem:[%s0 + $0x70] sm:$0xff]
    %v60 = vld [vmem:[%s0 + $0x78] sm:$0xff]
    %65 = vrot.lane.b32.xlu0 %v47, 16
    %v66 = vpop.permute.xlu0 %65
    %67 = vrot.lane.b32.xlu0 %v48, 16
    %v68 = vpop.permute.xlu0 %67
    %69 = vrot.lane.b32.xlu0 %v55, 16
    %v70 = vpop.permute.xlu0 %69
    %71 = vrot.lane.b32.xlu0 %v56, 16
    %v72 = vpop.permute.xlu0 %71
    %81 = vrot.lane.b32.xlu0 %v49, 32
    %v82 = vpop.permute.xlu0 %81
    %83 = vrot.lane.b32.xlu0 %v50, 32
    %v84 = vpop.permute.xlu0 %83
    %85 = vrot.lane.b32.xlu0 %v57, 32
    %v86 = vpop.permute.xlu0 %85
    %87 = vrot.lane.b32.xlu0 %v58, 32
    %v88 = vpop.permute.xlu0 %87
    %97 = vrot.lane.b32.xlu0 %v51, 48
    %v98 = vpop.permute.xlu0 %97
    %99 = vrot.lane.b32.xlu0 %v52, 48
    %v100 = vpop.permute.xlu0 %99
    %101 = vrot.lane.b32.xlu0 %v59, 48
    %v102 = vpop.permute.xlu0 %101
    %103 = vrot.lane.b32.xlu0 %v60, 48
    %v104 = vpop.permute.xlu0 %103
    %vm109 = vcmask 130048
    %v110 = vsel %vm109, %v45, %v66
    %v111 = vsel %vm109, %v46, %v68
    %v112 = vsel %vm109, %v53, %v70
    %v113 = vsel %vm109, %v54, %v72
    %vm114 = vcmask 261120
    %v115 = vsel %vm114, %v110, %v82
    %v116 = vsel %vm114, %v111, %v84
    %v117 = vsel %vm114, %v112, %v86
    %v118 = vsel %vm114, %v113, %v88
    %vm119 = vcmask 392192
    %v120 = vsel %vm119, %v115, %v98
    %v121 = vsel %vm119, %v116, %v100
    %v122 = vsel %vm119, %v117, %v102
    %v123 = vsel %vm119, %v118, %v104
    %v125 = vrot.slane %v123, 7
    %vm130 = vcmask 1040384
    %v131 = vrot.slane %v120, 7
    %v132 = vrot.slane %v121, 7
    %v133 = vsel %vm130, %v131, %v132
    %v134 = vrot.slane %v122, 7
    %v135 = vsel %vm130, %v132, %v134
    %v136 = vsel %vm130, %v134, %v125
    %v141 = vsel %vm130, %v125, %v131
    %v142 = vsel %vm37, 1, 0
    %v143 = vsel %vm38, 1, 0
    %v144 = vsel %vm39, 1, 0
    %v145 = vsel %vm40, 1, 0
    %vm146 = vcmp.eq.s32.totalorder %v142, 1
    %vm147 = vcmp.eq.s32.totalorder %v143, 1
    %vm148 = vcmp.eq.s32.totalorder %v144, 1
    %vm149 = vcmp.eq.s32.totalorder %v145, 1
    %v150 = vsel %vm146, %v141, 0.0
    %v151 = vsel %vm147, %v133, 0.0
    %v152 = vsel %vm148, %v135, 0.0
    %v153 = vsel %vm149, %v136, 0.0
    %vm154 = vcmask 1046528
    %v155 = vrot.slane %v120, 1
    %v156 = vrot.slane %v121, 1
    %v157 = vsel %vm154, %v155, %v156
    %v158 = vrot.slane %v122, 1
    %v159 = vsel %vm154, %v156, %v158
    %v160 = vrot.slane %v123, 1
    %v161 = vsel %vm154, %v158, %v160
    %v167 = vsel %vm154, %v160, %v155
    %v168 = vsel %vm41, 1, 0
    %v169 = vsel %vm42, 1, 0
    %v170 = vsel %vm43, 1, 0
    %v171 = vsel %vm44, 1, 0
    %vm172 = vcmp.eq.s32.totalorder %v168, 1
    %vm173 = vcmp.eq.s32.totalorder %v169, 1
    %vm174 = vcmp.eq.s32.totalorder %v170, 1
    %vm175 = vcmp.eq.s32.totalorder %v171, 1
    %v176 = vsel %vm172, %v157, 0.0
    %v177 = vsel %vm173, %v159, 0.0
    %v178 = vsel %vm174, %v161, 0.0
    %v179 = vsel %vm175, %v167, 0.0
    %180 = vrot.lane.b32.xlu0 %v120, 64
    %v181 = vpop.permute.xlu0 %180
    %182 = vrot.lane.b32.xlu0 %v121, 64
    %v183 = vpop.permute.xlu0 %182
    %184 = vrot.lane.b32.xlu0 %v122, 64
    %v185 = vpop.permute.xlu0 %184
    %186 = vrot.lane.b32.xlu0 %v123, 64
    %v187 = vpop.permute.xlu0 %186
    %vm192 = vcmask 523264
    %v193 = vsel %vm192, %v150, %v181
    %v194 = vsel %vm192, %v151, %v183
    %v195 = vsel %vm192, %v152, %v185
    %v196 = vsel %vm192, %v153, %v187
    %v197 = vpack.c.bf16 %v194, %v193
    %v198 = vpack.c.bf16 %v177, %v176
    %v199 = vpack.c.bf16 %v196, %v195
    %v200 = vpack.c.bf16 %v179, %v178
    %v201 = vld [vmem:[%s1] sm:$0xf]
    %v202 = vld [vmem:[%s1 + $0x4] sm:$0xf]
    %v203 = vld [vmem:[%s1 + $0x8] sm:$0xf]
    %v204 = vld [vmem:[%s1 + $0xc] sm:$0xf]
    %v205 = vld [vmem:[%s1 + $0x10] sm:$0xf]
    %v206 = vld [vmem:[%s1 + $0x14] sm:$0xf]
    %v207 = vld [vmem:[%s1 + $0x18] sm:$0xf]
    %v208 = vld [vmem:[%s1 + $0x1c] sm:$0xf]
    %v209 = vld [vmem:[%s1 + $0x20] sm:$0xf]
    %v210 = vld [vmem:[%s1 + $0x24] sm:$0xf]
    %v211 = vld [vmem:[%s1 + $0x28] sm:$0xf]
    %v212 = vld [vmem:[%s1 + $0x2c] sm:$0xf]
    %v213 = vld [vmem:[%s1 + $0x30] sm:$0xf]
    %v214 = vld [vmem:[%s1 + $0x34] sm:$0xf]
    %v215 = vld [vmem:[%s1 + $0x38] sm:$0xf]
    %v216 = vld [vmem:[%s1 + $0x3c] sm:$0xf]
    %v217 = vld [vmem:[%s1 + $0x40] sm:$0xf]
    %v218 = vld [vmem:[%s1 + $0x44] sm:$0xf]
    %v219 = vld [vmem:[%s1 + $0x48] sm:$0xf]
    %v220 = vld [vmem:[%s1 + $0x4c] sm:$0xf]
    %v221 = vld [vmem:[%s1 + $0x50] sm:$0xf]
    %v222 = vld [vmem:[%s1 + $0x54] sm:$0xf]
    %v223 = vld [vmem:[%s1 + $0x58] sm:$0xf]
    %v224 = vld [vmem:[%s1 + $0x5c] sm:$0xf]
    %v249 = vunpack.c.l.b16 %v201
    %v250 = vunpack.c.l.b16 %v202
    %v251 = vunpack.c.l.b16 %v203
    %v252 = vunpack.c.l.b16 %v204
    %v253 = vunpack.c.l.b16 %v205
    %v254 = vunpack.c.l.b16 %v206
    %v255 = vunpack.c.l.b16 %v207
    %v256 = vunpack.c.l.b16 %v208
    %v257 = vunpack.c.l.b16 %v209
    %v258 = vunpack.c.l.b16 %v210
    %v259 = vunpack.c.l.b16 %v211
    %v260 = vunpack.c.l.b16 %v212
    %v261 = vunpack.c.l.b16 %v213
    %v262 = vunpack.c.l.b16 %v214
    %v263 = vunpack.c.l.b16 %v215
    %v264 = vunpack.c.l.b16 %v216
    %v265 = vunpack.c.l.b16 %v217
    %v266 = vunpack.c.l.b16 %v218
    %v267 = vunpack.c.l.b16 %v219
    %v268 = vunpack.c.l.b16 %v220
    %v269 = vunpack.c.l.b16 %v221
    %v270 = vunpack.c.l.b16 %v222
    %v271 = vunpack.c.l.b16 %v223
    %v272 = vunpack.c.l.b16 %v224
    %v273 = vpack.c.b16 %v250, %v249
    %v274 = vpack.c.b16 %v252, %v251
    %v275 = vpack.c.b16 %v254, %v253
    %v276 = vpack.c.b16 %v256, %v255
    %v277 = vpack.c.b16 %v258, %v257
    %v278 = vpack.c.b16 %v260, %v259
    %v279 = vpack.c.b16 %v262, %v261
    %v280 = vpack.c.b16 %v264, %v263
    %v281 = vpack.c.b16 %v266, %v265
    %v282 = vpack.c.b16 %v268, %v267
    %v283 = vpack.c.b16 %v270, %v269
    %v284 = vpack.c.b16 %v272, %v271
    %v298 = vsel %vm192, %v198, 0
    %v301 = vsel %vm192, %v200, 0
    %303 = vmatprep.subr.bf16.mxu0 0
    %304 = vmatpush1.bf16.msra.mxu0 %v273
    %305 = vmatprep.subr.bf16.mxu0 0
    %306 = vmatpush1.bf16.msra.mxu0 %v274
    %307 = vmatprep.subr.bf16.mxu0 0
    %308 = vmatpush1.bf16.msra.mxu0 %v275
    %309 = vmatprep.subr.bf16.mxu0 0
    %310 = vmatpush1.bf16.msra.mxu0 %v276
    %311 = vmatprep.subr.bf16.mxu0 0
    %312 = vmatpush1.bf16.msra.mxu0 %v277
    %313 = vmatprep.subr.bf16.mxu0 0
    %314 = vmatpush1.bf16.msra.mxu0 %v278
    %315 = vmatprep.subr.bf16.mxu0 0
    %316 = vmatpush1.bf16.msra.mxu0 %v279
    %317 = vmatprep.subr.bf16.mxu0 0
    %318 = vmatpush1.bf16.msra.mxu0 %v280
    %319 = vmatprep.subr.bf16.mxu0 0
    %320 = vmatpush1.bf16.msra.mxu0 %v281
    %321 = vmatprep.subr.bf16.mxu0 0
    %322 = vmatpush1.bf16.msra.mxu0 %v282
    %323 = vmatprep.subr.bf16.mxu0 0
    %324 = vmatpush1.bf16.msra.mxu0 %v283
    %325 = vmatprep.subr.bf16.mxu0 0
    %326 = vmatpush1.bf16.msra.mxu0 %v284
    %327 = vmatprep.subr.bf16.mxu0 0
    %328 = vmatpush1.bf16.msra.mxu0 0
    %329 = vmatprep.subr.bf16.mxu0 0
    %330 = vmatpush1.bf16.msra.mxu0 0
    %331 = vmatprep.subr.bf16.mxu0 0
    %332 = vmatpush1.bf16.msra.mxu0 0
    %333 = vmatprep.subr.bf16.mxu0 0
    %334 = vmatpush1.bf16.msra.mxu0 0
    %335 = vmatprep.mubr.bf16.mxu0 %v298
    %336 = vmatmul.mubr.bf16.gmra.mrb[0].mxu0 %v197
    %v337 = vpop.f32.mrb[0].mxu0
    %v338 = vadd.f32 0.0, %v337
    %v339 = vpop.f32.mrb[0].mxu0
    %v340 = vpop.f32.mrb[0].mxu0
    %v341 = vadd.f32 0.0, %v340
    %v342 = vpop.f32.mrb[0].mxu0
    %343 = vmatprep.mubr.bf16.mxu0 %v301
    %344 = vmatmul.mubr.bf16.gmra.mrb[0].mxu0 %v199
    %v345 = vpop.f32.mrb[0].mxu0
    %v346 = vadd.f32 0.0, %v345
    %v347 = vpop.f32.mrb[0].mxu0
    %v348 = vpop.f32.mrb[0].mxu0
    %v349 = vadd.f32 0.0, %v348
    %v350 = vpop.f32.mrb[0].mxu0
    %351 = vdwg.mxu0
    %v352 = vld [vmem:[%s2] sm:$0x1]
    %v354 = vlaneseq
    %v355 = vshrl.u32 %v354, 7
    %v356 = vsub.s32 0, %v355
    %v357 = vrot.slane %v352, %v356
    %v359 = vmul.f32 %v338, %v357
    %v360 = vmul.f32 %v341, %v357
    %v361 = vmul.f32 %v346, %v357
    %v362 = vmul.f32 %v349, %v357
    %v363 = vld [vmem:[%s3] sm:$0x1]
    %v365 = vlaneseq
    %v366 = vshrl.u32 %v365, 7
    %v367 = vsub.s32 0, %v366
    %v368 = vrot.slane %v363, %v367
    %v370 = vadd.f32 %v359, %v368
    %v371 = vadd.f32 %v360, %v368
    %v372 = vadd.f32 %v361, %v368
    %v373 = vadd.f32 %v362, %v368
    %v374 = vmax.f32 %v370, 0.0
    %v375 = vmax.f32 %v371, 0.0
    %v376 = vmax.f32 %v372, 0.0
    %v377 = vmax.f32 %v373, 0.0
    %v379 = vrot.slane %v377, 7
    %v384 = vrot.slane %v374, 7
    %v385 = vrot.slane %v375, 7
    %v386 = vsel %vm130, %v384, %v385
    %v387 = vrot.slane %v376, 7
    %v388 = vsel %vm130, %v385, %v387
    %v389 = vsel %vm130, %v387, %v379
    %v394 = vsel %vm130, %v379, %v384
    %v395 = vsel %vm146, %v394, 0.0
    %v396 = vsel %vm147, %v386, 0.0
    %v397 = vsel %vm148, %v388, 0.0
    %v398 = vsel %vm149, %v389, 0.0
    %v399 = vrot.slane %v374, 1
    %v400 = vrot.slane %v375, 1
    %v401 = vsel %vm154, %v399, %v400
    %v402 = vrot.slane %v376, 1
    %v403 = vsel %vm154, %v400, %v402
    %v404 = vrot.slane %v377, 1
    %v405 = vsel %vm154, %v402, %v404
    %v411 = vsel %vm154, %v404, %v399
    %v412 = vsel %vm172, %v401, 0.0
    %v413 = vsel %vm173, %v403, 0.0
    %v414 = vsel %vm174, %v405, 0.0
    %v415 = vsel %vm175, %v411, 0.0
    %v416 = vpack.c.bf16 %v396, %v395
    %v417 = vpack.c.bf16 %v375, %v374
    %v418 = vpack.c.bf16 %v413, %v412
    %v419 = vpack.c.bf16 %v398, %v397
    %v420 = vpack.c.bf16 %v377, %v376
    %v421 = vpack.c.bf16 %v415, %v414
    %v422 = vld [vmem:[%s4] sm:$0xf]
    %v423 = vld [vmem:[%s4 + $0x4] sm:$0xf]
    %v424 = vld [vmem:[%s4 + $0x8] sm:$0xf]
    %v425 = vld [vmem:[%s4 + $0xc] sm:$0xf]
    %v426 = vld [vmem:[%s4 + $0x10] sm:$0xf]
    %v427 = vld [vmem:[%s4 + $0x14] sm:$0xf]
    %v428 = vld [vmem:[%s4 + $0x18] sm:$0xf]
    %v429 = vld [vmem:[%s4 + $0x1c] sm:$0xf]
    %v430 = vld [vmem:[%s4 + $0x20] sm:$0xf]
    %v431 = vld [vmem:[%s4 + $0x24] sm:$0xf]
    %v432 = vld [vmem:[%s4 + $0x28] sm:$0xf]
    %v433 = vld [vmem:[%s4 + $0x2c] sm:$0xf]
    %v434 = vld [vmem:[%s4 + $0x30] sm:$0xf]
    %v435 = vld [vmem:[%s4 + $0x34] sm:$0xf]
    %v436 = vld [vmem:[%s4 + $0x38] sm:$0xf]
    %v437 = vld [vmem:[%s4 + $0x3c] sm:$0xf]
    %v438 = vld [vmem:[%s4 + $0x40] sm:$0xf]
    %v439 = vld [vmem:[%s4 + $0x44] sm:$0xf]
    %v440 = vld [vmem:[%s4 + $0x48] sm:$0xf]
    %v441 = vld [vmem:[%s4 + $0x4c] sm:$0xf]
    %v442 = vld [vmem:[%s4 + $0x50] sm:$0xf]
    %v443 = vld [vmem:[%s4 + $0x54] sm:$0xf]
    %v444 = vld [vmem:[%s4 + $0x58] sm:$0xf]
    %v445 = vld [vmem:[%s4 + $0x5c] sm:$0xf]
    %v446 = vld [vmem:[%s4 + $0x60] sm:$0xf]
    %v447 = vld [vmem:[%s4 + $0x64] sm:$0xf]
    %v448 = vld [vmem:[%s4 + $0x68] sm:$0xf]
    %v449 = vld [vmem:[%s4 + $0x6c] sm:$0xf]
    %v450 = vld [vmem:[%s4 + $0x70] sm:$0xf]
    %v451 = vld [vmem:[%s4 + $0x74] sm:$0xf]
    %v452 = vld [vmem:[%s4 + $0x78] sm:$0xf]
    %v453 = vld [vmem:[%s4 + $0x7c] sm:$0xf]
    %v454 = vld [vmem:[%s4 + $0x80] sm:$0xf]
    %v455 = vld [vmem:[%s4 + $0x84] sm:$0xf]
    %v456 = vld [vmem:[%s4 + $0x88] sm:$0xf]
    %v457 = vld [vmem:[%s4 + $0x8c] sm:$0xf]
    %v458 = vld [vmem:[%s4 + $0x90] sm:$0xf]
    %v459 = vld [vmem:[%s4 + $0x94] sm:$0xf]
    %v460 = vld [vmem:[%s4 + $0x98] sm:$0xf]
    %v461 = vld [vmem:[%s4 + $0x9c] sm:$0xf]
    %v462 = vld [vmem:[%s4 + $0xa0] sm:$0xf]
    %v463 = vld [vmem:[%s4 + $0xa4] sm:$0xf]
    %v464 = vld [vmem:[%s4 + $0xa8] sm:$0xf]
    %v465 = vld [vmem:[%s4 + $0xac] sm:$0xf]
    %v466 = vld [vmem:[%s4 + $0xb0] sm:$0xf]
    %v467 = vld [vmem:[%s4 + $0xb4] sm:$0xf]
    %v468 = vld [vmem:[%s4 + $0xb8] sm:$0xf]
    %v469 = vld [vmem:[%s4 + $0xbc] sm:$0xf]
    %v518 = vunpack.c.l.b16 %v422
    %v519 = vunpack.c.l.b16 %v423
    %v520 = vunpack.c.l.b16 %v424
    %v521 = vunpack.c.l.b16 %v425
    %v522 = vunpack.c.l.b16 %v426
    %v523 = vunpack.c.l.b16 %v427
    %v524 = vunpack.c.l.b16 %v428
    %v525 = vunpack.c.l.b16 %v429
    %v526 = vunpack.c.l.b16 %v430
    %v527 = vunpack.c.l.b16 %v431
    %v528 = vunpack.c.l.b16 %v432
    %v529 = vunpack.c.l.b16 %v433
    %v530 = vunpack.c.l.b16 %v434
    %v531 = vunpack.c.l.b16 %v435
    %v532 = vunpack.c.l.b16 %v436
    %v533 = vunpack.c.l.b16 %v437
    %v534 = vunpack.c.l.b16 %v438
    %v535 = vunpack.c.l.b16 %v439
    %v536 = vunpack.c.l.b16 %v440
    %v537 = vunpack.c.l.b16 %v441
    %v538 = vunpack.c.l.b16 %v442
    %v539 = vunpack.c.l.b16 %v443
    %v540 = vunpack.c.l.b16 %v444
    %v541 = vunpack.c.l.b16 %v445
    %v542 = vunpack.c.l.b16 %v446
    %v543 = vunpack.c.l.b16 %v447
    %v544 = vunpack.c.l.b16 %v448
    %v545 = vunpack.c.l.b16 %v449
    %v546 = vunpack.c.l.b16 %v450
    %v547 = vunpack.c.l.b16 %v451
    %v548 = vunpack.c.l.b16 %v452
    %v549 = vunpack.c.l.b16 %v453
    %v550 = vunpack.c.l.b16 %v454
    %v551 = vunpack.c.l.b16 %v455
    %v552 = vunpack.c.l.b16 %v456
    %v553 = vunpack.c.l.b16 %v457
    %v554 = vunpack.c.l.b16 %v458
    %v555 = vunpack.c.l.b16 %v459
    %v556 = vunpack.c.l.b16 %v460
    %v557 = vunpack.c.l.b16 %v461
    %v558 = vunpack.c.l.b16 %v462
    %v559 = vunpack.c.l.b16 %v463
    %v560 = vunpack.c.l.b16 %v464
    %v561 = vunpack.c.l.b16 %v465
    %v562 = vunpack.c.l.b16 %v466
    %v563 = vunpack.c.l.b16 %v467
    %v564 = vunpack.c.l.b16 %v468
    %v565 = vunpack.c.l.b16 %v469
    %v566 = vpack.c.b16 %v519, %v518
    %v567 = vpack.c.b16 %v521, %v520
    %v568 = vpack.c.b16 %v523, %v522
    %v569 = vpack.c.b16 %v525, %v524
    %v570 = vpack.c.b16 %v527, %v526
    %v571 = vpack.c.b16 %v529, %v528
    %v572 = vpack.c.b16 %v531, %v530
    %v573 = vpack.c.b16 %v533, %v532
    %v574 = vpack.c.b16 %v535, %v534
    %v575 = vpack.c.b16 %v537, %v536
    %v576 = vpack.c.b16 %v539, %v538
    %v577 = vpack.c.b16 %v541, %v540
    %v578 = vpack.c.b16 %v543, %v542
    %v579 = vpack.c.b16 %v545, %v544
    %v580 = vpack.c.b16 %v547, %v546
    %v581 = vpack.c.b16 %v549, %v548
    %v582 = vpack.c.b16 %v551, %v550
    %v583 = vpack.c.b16 %v553, %v552
    %v584 = vpack.c.b16 %v555, %v554
    %v585 = vpack.c.b16 %v557, %v556
    %v586 = vpack.c.b16 %v559, %v558
    %v587 = vpack.c.b16 %v561, %v560
    %v588 = vpack.c.b16 %v563, %v562
    %v589 = vpack.c.b16 %v565, %v564
    %614 = vmatprep.subr.bf16.mxu0 0
    %615 = vmatpush1.bf16.msra.mxu0 %v566
    %616 = vmatprep.subr.bf16.mxu0 0
    %617 = vmatpush1.bf16.msra.mxu0 %v567
    %618 = vmatprep.subr.bf16.mxu0 0
    %619 = vmatpush1.bf16.msra.mxu0 %v568
    %620 = vmatprep.subr.bf16.mxu0 0
    %621 = vmatpush1.bf16.msra.mxu0 %v569
    %622 = vmatprep.subr.bf16.mxu0 0
    %623 = vmatpush1.bf16.msra.mxu0 %v570
    %624 = vmatprep.subr.bf16.mxu0 0
    %625 = vmatpush1.bf16.msra.mxu0 %v571
    %626 = vmatprep.subr.bf16.mxu0 0
    %627 = vmatpush1.bf16.msra.mxu0 %v572
    %628 = vmatprep.subr.bf16.mxu0 0
    %629 = vmatpush1.bf16.msra.mxu0 %v573
    %630 = vmatprep.subr.bf16.mxu0 0
    %631 = vmatpush1.bf16.msra.mxu0 %v574
    %632 = vmatprep.subr.bf16.mxu0 0
    %633 = vmatpush1.bf16.msra.mxu0 %v575
    %634 = vmatprep.subr.bf16.mxu0 0
    %635 = vmatpush1.bf16.msra.mxu0 %v576
    %636 = vmatprep.subr.bf16.mxu0 0
    %637 = vmatpush1.bf16.msra.mxu0 %v577
    %638 = vmatprep.subr.bf16.mxu0 0
    %639 = vmatpush1.bf16.msra.mxu0 %v578
    %640 = vmatprep.subr.bf16.mxu0 0
    %641 = vmatpush1.bf16.msra.mxu0 %v579
    %642 = vmatprep.subr.bf16.mxu0 0
    %643 = vmatpush1.bf16.msra.mxu0 %v580
    %644 = vmatprep.subr.bf16.mxu0 0
    %645 = vmatpush1.bf16.msra.mxu0 %v581
    %646 = vmatprep.mubr.bf16.mxu0 %v417
    %647 = vmatmul.mubr.bf16.gmra.mrb[0].mxu0 %v416
    %v648 = vpop.f32.mrb[0].mxu0
    %v649 = vadd.f32 0.0, %v648
    %v650 = vpop.f32.mrb[0].mxu0
    %v651 = vpop.f32.mrb[0].mxu0
    %v652 = vadd.f32 0.0, %v651
    %v653 = vpop.f32.mrb[0].mxu0
    %654 = vmatprep.mubr.bf16.mxu0 %v420
    %655 = vmatmul.mubr.bf16.gmra.mrb[0].mxu0 %v419
    %v656 = vpop.f32.mrb[0].mxu0
    %v657 = vadd.f32 0.0, %v656
    %v658 = vpop.f32.mrb[0].mxu0
    %v659 = vpop.f32.mrb[0].mxu0
    %v660 = vadd.f32 0.0, %v659
    %v661 = vpop.f32.mrb[0].mxu0
    %662 = vdwg.mxu0
    %663 = vmatprep.subr.bf16.mxu0 0
    %664 = vmatpush1.bf16.msra.mxu0 %v582
    %665 = vmatprep.subr.bf16.mxu0 0
    %666 = vmatpush1.bf16.msra.mxu0 %v583
    %667 = vmatprep.subr.bf16.mxu0 0
    %668 = vmatpush1.bf16.msra.mxu0 %v584
    %669 = vmatprep.subr.bf16.mxu0 0
    %670 = vmatpush1.bf16.msra.mxu0 %v585
    %671 = vmatprep.subr.bf16.mxu0 0
    %672 = vmatpush1.bf16.msra.mxu0 %v586
    %673 = vmatprep.subr.bf16.mxu0 0
    %674 = vmatpush1.bf16.msra.mxu0 %v587
    %675 = vmatprep.subr.bf16.mxu0 0
    %676 = vmatpush1.bf16.msra.mxu0 %v588
    %677 = vmatprep.subr.bf16.mxu0 0
    %678 = vmatpush1.bf16.msra.mxu0 %v589
    %679 = vmatprep.subr.bf16.mxu0 0
    %680 = vmatpush1.bf16.msra.mxu0 0
    %681 = vmatprep.subr.bf16.mxu0 0
    %682 = vmatpush1.bf16.msra.mxu0 0
    %683 = vmatprep.subr.bf16.mxu0 0
    %684 = vmatpush1.bf16.msra.mxu0 0
    %685 = vmatprep.subr.bf16.mxu0 0
    %686 = vmatpush1.bf16.msra.mxu0 0
    %687 = vmatprep.subr.bf16.mxu0 0
    %688 = vmatpush1.bf16.msra.mxu0 0
    %689 = vmatprep.subr.bf16.mxu0 0
    %690 = vmatpush1.bf16.msra.mxu0 0
    %691 = vmatprep.subr.bf16.mxu0 0
    %692 = vmatpush1.bf16.msra.mxu0 0
    %693 = vmatprep.subr.bf16.mxu0 0
    %694 = vmatpush1.bf16.msra.mxu0 0
    %695 = vmatprep.mubr.bf16.mxu0 0
    %696 = vmatmul.mubr.bf16.gmra.mrb[0].mxu0 %v418
    %v697 = vpop.f32.mrb[0].mxu0
    %v698 = vadd.f32 %v649, %v697
    %v699 = vpop.f32.mrb[0].mxu0
    %v700 = vpop.f32.mrb[0].mxu0
    %v701 = vadd.f32 %v652, %v700
    %v702 = vpop.f32.mrb[0].mxu0
    %703 = vmatprep.mubr.bf16.mxu0 0
    %704 = vmatmul.mubr.bf16.gmra.mrb[0].mxu0 %v421
    %v705 = vpop.f32.mrb[0].mxu0
    %v706 = vadd.f32 %v657, %v705
    %v707 = vpop.f32.mrb[0].mxu0
    %v708 = vpop.f32.mrb[0].mxu0
    %v709 = vadd.f32 %v660, %v708
    %v710 = vpop.f32.mrb[0].mxu0
    %711 = vdwg.mxu0
    %v712 = vld [vmem:[%s5] sm:$0x1]
    %v714 = vlaneseq
    %v715 = vshrl.u32 %v714, 7
    %v716 = vsub.s32 0, %v715
    %v717 = vrot.slane %v712, %v716
    %v719 = vmul.f32 %v698, %v717
    %v720 = vmul.f32 %v701, %v717
    %v721 = vmul.f32 %v706, %v717
    %v722 = vmul.f32 %v709, %v717
    %v723 = vld [vmem:[%s6] sm:$0x1]
    %v725 = vlaneseq
    %v726 = vshrl.u32 %v725, 7
    %v727 = vsub.s32 0, %v726
    %v728 = vrot.slane %v723, %v727
    %v730 = vadd.f32 %v719, %v728
    %v731 = vadd.f32 %v720, %v728
    %v732 = vadd.f32 %v721, %v728
    %v733 = vadd.f32 %v722, %v728
    %v734 = vmax.f32 %v730, 0.0
    %v735 = vmax.f32 %v731, 0.0
    %v736 = vmax.f32 %v732, 0.0
    %v737 = vmax.f32 %v733, 0.0
    %738 = vst.msk [vmem:[#allocation2] sm:$0xff] %vm109, %v734
    %739 = vst.msk [vmem:[#allocation2 + $0x8] sm:$0xff] %vm109, %v735
    %740 = vst.msk [vmem:[#allocation2 + $0x80] sm:$0xff] %vm109, %v736
    %741 = vst.msk [vmem:[#allocation2 + $0x88] sm:$0xff] %vm109, %v737
    %746 = vrot.lane.b32.xlu0 %v734, 112
    %v747 = vpop.permute.xlu0 %746
    %748 = vrot.lane.b32.xlu0 %v735, 112
    %v749 = vpop.permute.xlu0 %748
    %750 = vrot.lane.b32.xlu0 %v736, 112
    %v751 = vpop.permute.xlu0 %750
    %752 = vrot.lane.b32.xlu0 %v737, 112
    %v753 = vpop.permute.xlu0 %752
    %s758 = scalar_lea.vmem [#allocation2], 16
    %759 = vst.msk [vmem:[%s758] sm:$0xff] %vm109, %v747
    %760 = vst.msk [vmem:[%s758 + $0x8] sm:$0xff] %vm109, %v749
    %761 = vst.msk [vmem:[%s758 + $0x80] sm:$0xff] %vm109, %v751
    %762 = vst.msk [vmem:[%s758 + $0x88] sm:$0xff] %vm109, %v753
    %763 = vrot.lane.b32.xlu0 %v734, 96
    %v764 = vpop.permute.xlu0 %763
    %765 = vrot.lane.b32.xlu0 %v735, 96
    %v766 = vpop.permute.xlu0 %765
    %767 = vrot.lane.b32.xlu0 %v736, 96
    %v768 = vpop.permute.xlu0 %767
    %769 = vrot.lane.b32.xlu0 %v737, 96
    %v770 = vpop.permute.xlu0 %769
    %s775 = scalar_lea.vmem [#allocation2], 32
    %776 = vst.msk [vmem:[%s775] sm:$0xff] %vm109, %v764
    %777 = vst.msk [vmem:[%s775 + $0x8] sm:$0xff] %vm109, %v766
    %778 = vst.msk [vmem:[%s775 + $0x80] sm:$0xff] %vm109, %v768
    %779 = vst.msk [vmem:[%s775 + $0x88] sm:$0xff] %vm109, %v770
    %780 = vrot.lane.b32.xlu0 %v734, 80
    %v781 = vpop.permute.xlu0 %780
    %782 = vrot.lane.b32.xlu0 %v735, 80
    %v783 = vpop.permute.xlu0 %782
    %784 = vrot.lane.b32.xlu0 %v736, 80
    %v785 = vpop.permute.xlu0 %784
    %786 = vrot.lane.b32.xlu0 %v737, 80
    %v787 = vpop.permute.xlu0 %786
    %s792 = scalar_lea.vmem [#allocation2], 48
    %793 = vst.msk [vmem:[%s792] sm:$0xff] %vm109, %v781
    %794 = vst.msk [vmem:[%s792 + $0x8] sm:$0xff] %vm109, %v783
    %795 = vst.msk [vmem:[%s792 + $0x80] sm:$0xff] %vm109, %v785
    %796 = vst.msk [vmem:[%s792 + $0x88] sm:$0xff] %vm109, %v787
    %797 = vrot.lane.b32.xlu0 %v734, 64
    %v798 = vpop.permute.xlu0 %797
    %799 = vrot.lane.b32.xlu0 %v735, 64
    %v800 = vpop.permute.xlu0 %799
    %801 = vrot.lane.b32.xlu0 %v736, 64
    %v802 = vpop.permute.xlu0 %801
    %803 = vrot.lane.b32.xlu0 %v737, 64
    %v804 = vpop.permute.xlu0 %803
    %s809 = scalar_lea.vmem [#allocation2], 64
    %810 = vst.msk [vmem:[%s809] sm:$0xff] %vm109, %v798
    %811 = vst.msk [vmem:[%s809 + $0x8] sm:$0xff] %vm109, %v800
    %812 = vst.msk [vmem:[%s809 + $0x80] sm:$0xff] %vm109, %v802
    %813 = vst.msk [vmem:[%s809 + $0x88] sm:$0xff] %vm109, %v804
    %814 = vrot.lane.b32.xlu0 %v734, 48
    %v815 = vpop.permute.xlu0 %814
    %816 = vrot.lane.b32.xlu0 %v735, 48
    %v817 = vpop.permute.xlu0 %816
    %818 = vrot.lane.b32.xlu0 %v736, 48
    %v819 = vpop.permute.xlu0 %818
    %820 = vrot.lane.b32.xlu0 %v737, 48
    %v821 = vpop.permute.xlu0 %820
    %s826 = scalar_lea.vmem [#allocation2], 80
    %827 = vst.msk [vmem:[%s826] sm:$0xff] %vm109, %v815
    %828 = vst.msk [vmem:[%s826 + $0x8] sm:$0xff] %vm109, %v817
    %829 = vst.msk [vmem:[%s826 + $0x80] sm:$0xff] %vm109, %v819
    %830 = vst.msk [vmem:[%s826 + $0x88] sm:$0xff] %vm109, %v821
    %831 = vrot.lane.b32.xlu0 %v734, 32
    %v832 = vpop.permute.xlu0 %831
    %833 = vrot.lane.b32.xlu0 %v735, 32
    %v834 = vpop.permute.xlu0 %833
    %835 = vrot.lane.b32.xlu0 %v736, 32
    %v836 = vpop.permute.xlu0 %835
    %837 = vrot.lane.b32.xlu0 %v737, 32
    %v838 = vpop.permute.xlu0 %837
    %s843 = scalar_lea.vmem [#allocation2], 96
    %844 = vst.msk [vmem:[%s843] sm:$0xff] %vm109, %v832
    %845 = vst.msk [vmem:[%s843 + $0x8] sm:$0xff] %vm109, %v834
    %846 = vst.msk [vmem:[%s843 + $0x80] sm:$0xff] %vm109, %v836
    %847 = vst.msk [vmem:[%s843 + $0x88] sm:$0xff] %vm109, %v838
    %848 = vrot.lane.b32.xlu0 %v734, 16
    %v849 = vpop.permute.xlu0 %848
    %850 = vrot.lane.b32.xlu0 %v735, 16
    %v851 = vpop.permute.xlu0 %850
    %852 = vrot.lane.b32.xlu0 %v736, 16
    %v853 = vpop.permute.xlu0 %852
    %854 = vrot.lane.b32.xlu0 %v737, 16
    %v855 = vpop.permute.xlu0 %854
    %s860 = scalar_lea.vmem [#allocation2], 112
    %861 = vst.msk [vmem:[%s860] sm:$0xff] %vm109, %v849
    %862 = vst.msk [vmem:[%s860 + $0x8] sm:$0xff] %vm109, %v851
    %863 = vst.msk [vmem:[%s860 + $0x80] sm:$0xff] %vm109, %v853
    %864 = vst.msk [vmem:[%s860 + $0x88] sm:$0xff] %vm109, %v855
    // Predicated region
    $region30: #{a_call__.1} parent=1 // pred_check
      _
    $region31: #{a_call__.1} parent=1 // pred_check_branch
      %866 = sbr.rel (0) target = $region33
    $region32: #{a_call__.1} parent=1 // pred_region
      %s868 = ssub.s32 4096, 4096
      %869 = vsyncadd [#allocation3], %s868
      %s870 = sshll.u32 [#allocation2], 4
      %s871 = int_to_ptr.vmem [resolvable:$true] %s870
      %876 = dma.vmem_to_hbm [thread:$0]  %s871, 4096, %s7, [#allocation3], 128, 128, 8
    $region33: #{a_call__.1} parent=1 // pred_fallthru
      _
    // Predicated region
    $region34: #{a_call__.1} parent=1 // pred_check
      _
    $region35: #{a_call__.1} parent=1 // pred_check_branch
      %878 = sbr.rel (0) target = $region37
    $region36: #{a_call__.1} parent=1 // pred_region
      %879 = dma.done [#allocation3], 4096
    $region37: #{a_call__.1} parent=1 // pred_fallthru
      _
    %880 = vsyncpa [#allocation3], 1

</llo_original>
